<compile_context>
chip_gen: v5e
topology: v5e:2x2
jax: 0.10.0
libtpu: 0.0.40
codegen_flags: <defaults>
</compile_context>

<pallas_src>
import math

import jax
import jax.numpy as jnp
from jax import lax
from jax.experimental import pallas as pl
from jax.experimental.pallas import tpu as pltpu


def _make_kernel(*, rows: int, tile_rows: int, tiles_per_core: int, needs_mask: bool):
    def kernel(x_ref, t_ref, out_ref, acc_ref):
        c = pl.program_id(0)   # core (parallel) axis
        i = pl.program_id(1)   # reduction axis within this core

        # Zero the resident per-core accumulator at the start of each core's slice.
        @pl.when(i == 0)
        def _init():
            acc_ref[...] = jnp.zeros_like(acc_ref)

        # Cast to f32 BEFORE subtracting (avoids bf16 cancellation when x ~= target).
        x = x_ref[...].astype(jnp.float32)
        t = t_ref[...].astype(jnp.float32)
        d = x - t
        sq = d * d

        if needs_mask:
            # Zero contributions from rows past the end of the real data
            # (Pallas reads past-the-end block regions with unspecified values).
            tile_idx = c * tiles_per_core + i
            row_start = tile_idx * tile_rows
            local_row = lax.broadcasted_iota(jnp.int32, sq.shape, 0)
            valid = (row_start + local_row) < rows
            sq = jnp.where(valid, sq, 0.0)

        # Sublane-only reduce into the lane-wise partial-sum accumulator.
        acc_ref[...] += jnp.sum(sq, axis=0, keepdims=True)

        # Single cross-lane reduce, once per core, on the last step only.
        @pl.when(i == pl.num_programs(1) - 1)
        def _finalize():
            total = jnp.sum(acc_ref[...])
            out_ref[...] = jnp.full((1, 128), total, dtype=jnp.float32)

    return kernel


def content_loss_forward(x, target, *, lanes: int | None = None, max_tile_rows: int = 2048):
    """Returns (output, loss): output is `x` (pass-through, no copy) and
    loss == mean((x - target)**2) over all elements (float32)."""
    assert x.shape == target.shape and x.dtype == target.dtype

    n = math.prod(x.shape)                      # static python int
    itemsize = jnp.dtype(x.dtype).itemsize
    sublane = max(8, 32 // itemsize)            # f32: 8, bf16: 16, int8/fp8: 32

    xf = x.reshape(-1)
    tf = target.reshape(-1)

    if lanes is None:
        lanes = next((l for l in (512, 256, 128) if n % l == 0), 128)
    assert lanes % 128 == 0, "lane dim must be a multiple of 128"

    n_pad = ((n + lanes - 1) // lanes) * lanes
    if n_pad != n:
        # TODO(synk): rare corner case (n not a multiple of 128) costs one full
        # HBM copy per operand; zeros in BOTH operands keep the sum exact.
        xf = jnp.pad(xf, (0, n_pad - n))
        tf = jnp.pad(tf, (0, n_pad - n))

    rows = n_pad // lanes
    x2d = xf.reshape(rows, lanes)               # contiguous reshape: no HBM copy
    t2d = tf.reshape(rows, lanes)

    if rows <= max_tile_rows:
        tile_rows = rows                        # block dim == full array dim -> always legal
    else:
        tile_rows = max(sublane, (max_tile_rows // sublane) * sublane)

    num_tiles = -(-rows // tile_rows)
    num_cores = 2 if num_tiles >= 2 else 1      # v7x: split stream across both TCs
    tiles_per_core = -(-num_tiles // num_cores)
    needs_mask = (num_cores * tiles_per_core * tile_rows) != rows

    def in_index_map(c, i):
        # Clamp phantom blocks (past the last real tile); the in-kernel mask
        # zeroes their contribution.
        blk = jnp.minimum(c * tiles_per_core + i, num_tiles - 1)
        return (blk, 0)

    kernel = _make_kernel(rows=rows, tile_rows=tile_rows,
                          tiles_per_core=tiles_per_core, needs_mask=needs_mask)

    out = pl.pallas_call(
        kernel,
        out_shape=jax.ShapeDtypeStruct((1, 128 * num_cores), jnp.float32),
        grid_spec=pltpu.PrefetchScalarGridSpec(
            num_scalar_prefetch=0,
            grid=(num_cores, tiles_per_core),
            in_specs=[
                pl.BlockSpec((tile_rows, lanes), in_index_map),
                pl.BlockSpec((tile_rows, lanes), in_index_map),
            ],
            # One lane-dense (1, 128) block per core; written once per core.
            out_specs=pl.BlockSpec((1, 128), lambda c, i: (0, c)),
            scratch_shapes=[pltpu.VMEM((1, lanes), jnp.float32)],
        ),
        compiler_params=pltpu.CompilerParams(
            dimension_semantics=("parallel", "arbitrary"),
            vmem_limit_bytes=48 * 1024 * 1024,
        ),
        cost_estimate=pl.CostEstimate(
            flops=3 * n,
            transcendentals=0,
            bytes_accessed=2 * n * itemsize + 4 * 128 * num_cores,
        ),
    )(x2d, t2d)

    partials = out.reshape(num_cores, 128)[:, 0]
    loss = jnp.sum(partials) * jnp.float32(1.0 / n)

    # Pass-through: return the input unchanged (no kernel copy, no extra HBM write).
    return x, loss


if __name__ == "__main__":
    key = jax.random.PRNGKey(0)
    k1, k2, k3, k4 = jax.random.split(key, 4)

    # Small shapes consistent with a conv feature map: N=2, C=4, H=W=16.
    x = jax.random.normal(k1, (2, 4, 16, 16), dtype=jnp.float32)
    target = jax.random.normal(k2, (2, 4, 16, 16), dtype=jnp.float32)
    ref_loss = jnp.mean((x - target) ** 2)

    # Default path: single tile, zero-copy reshape, no mask.
    out, loss = content_loss_forward(x, target)
    out = jax.block_until_ready(out)
    loss = jax.block_until_ready(loss)
    assert jnp.allclose(out, x), "pass-through output mismatch"
    assert jnp.allclose(loss, ref_loss, rtol=1e-5, atol=1e-6), "mse loss mismatch"

    # Multi-tile grid + 2-way core split (init/accumulate/finalize per core).
    _, loss2 = content_loss_forward(x, target, lanes=128, max_tile_rows=8)
    loss2 = jax.block_until_ready(loss2)
    assert jnp.allclose(loss2, ref_loss, rtol=1e-5, atol=1e-6), "tiled mse loss mismatch"

    # Ragged-tail path: rows not a multiple of the per-core tile footprint -> in-kernel mask.
    x3 = jax.random.normal(k3, (2, 3, 16, 16), dtype=jnp.float32)
    t3 = jax.random.normal(k4, (2, 3, 16, 16), dtype=jnp.float32)
    ref3 = jnp.mean((x3 - t3) ** 2)
    _, loss3 = content_loss_forward(x3, t3, lanes=128, max_tile_rows=8)
    loss3 = jax.block_until_ready(loss3)
    assert jnp.allclose(loss3, ref3, rtol=1e-5, atol=1e-6), "masked-tail mse loss mismatch"

    # Fallback path: n not a multiple of 128 (minimal zero-pad of both operands).
    x4 = jax.random.normal(k3, (3, 5, 7), dtype=jnp.float32)
    t4 = jax.random.normal(k4, (3, 5, 7), dtype=jnp.float32)
    ref4 = jnp.mean((x4 - t4) ** 2)
    _, loss4 = content_loss_forward(x4, t4)
    loss4 = jax.block_until_ready(loss4)
    assert jnp.allclose(loss4, ref4, rtol=1e-5, atol=1e-6), "padded-fallback mse loss mismatch"

    print("KERNEL_OK")
</pallas_src>

<mosaic_0001>
module attributes {stable_mosaic.version = 11 : i64} {
  func.func @kernel(%arg0: i32, %arg1: i32, %arg2: memref<4x512xf32, #tpu.memory_space<vmem>>, %arg3: memref<4x512xf32, #tpu.memory_space<vmem>>, %arg4: memref<1x128xf32, #tpu.memory_space<vmem>>, %arg5: memref<1x512xf32, #tpu.memory_space<vmem>>) attributes {dimension_semantics = [#tpu.dimension_semantics<parallel>, #tpu.dimension_semantics<arbitrary>], iteration_bounds = array<i64: 1, 1>, scalar_prefetch = 0 : i64, scratch_operands = 1 : i64, tpu.core_type = #tpu.core_type<tc>, window_params = [{transform_indices = @transform_0, window_bounds = array<i64: 4, 512>}, {transform_indices = @transform_1, window_bounds = array<i64: 4, 512>}, {transform_indices = @transform_2, window_bounds = array<i64: 1, 128>}]} {
    %c0_i32 = arith.constant 0 : i32
    %0 = arith.cmpi eq, %arg1, %c0_i32 : i32
    %1 = arith.extui %0 : i1 to i32
    %c0_i32_0 = arith.constant 0 : i32
    %2 = arith.cmpi ne, %1, %c0_i32_0 : i32
    scf.if %2 {
      %cst_10 = arith.constant 0.000000e+00 : f32
      %15 = vector.broadcast %cst_10 : f32 to vector<1x512xf32>
      %c0_11 = arith.constant 0 : index
      %c0_12 = arith.constant 0 : index
      %16 = vector.load %arg5[%c0_11, %c0_12] : memref<1x512xf32, #tpu.memory_space<vmem>>, vector<1x512xf32>
      tpu.vector_store %arg5[%c0_11, %c0_12], %15 {strides = array<i32>} : memref<1x512xf32, #tpu.memory_space<vmem>>, vector<1x512xf32>,
    } else {
    }
    %c0 = arith.constant 0 : index
    %c0_1 = arith.constant 0 : index
    %3 = vector.load %arg2[%c0, %c0_1] : memref<4x512xf32, #tpu.memory_space<vmem>>, vector<4x512xf32>
    %c0_2 = arith.constant 0 : index
    %c0_3 = arith.constant 0 : index
    %4 = vector.load %arg3[%c0_2, %c0_3] : memref<4x512xf32, #tpu.memory_space<vmem>>, vector<4x512xf32>
    %5 = arith.subf %3, %4 : vector<4x512xf32>
    %6 = arith.mulf %5, %5 : vector<4x512xf32>
    %c0_4 = arith.constant 0 : index
    %c0_5 = arith.constant 0 : index
    %7 = vector.load %arg5[%c0_4, %c0_5] : memref<1x512xf32, #tpu.memory_space<vmem>>, vector<1x512xf32>
    %cst = arith.constant dense<0.000000e+00> : vector<512xf32>
    %8 = vector.multi_reduction <add>, %6, %cst [0] : vector<4x512xf32> to vector<512xf32>
    %9 = vector.shape_cast %8 : vector<512xf32> to vector<1x512xf32>
    %10 = arith.addf %7, %9 : vector<1x512xf32>
    %c0_6 = arith.constant 0 : index
    %c0_7 = arith.constant 0 : index
    %11 = vector.load %arg5[%c0_6, %c0_7] : memref<1x512xf32, #tpu.memory_space<vmem>>, vector<1x512xf32>
    tpu.vector_store %arg5[%c0_6, %c0_7], %10 {strides = array<i32>} : memref<1x512xf32, #tpu.memory_space<vmem>>, vector<1x512xf32>,
    %c0_i32_8 = arith.constant 0 : i32
    %12 = arith.cmpi eq, %arg1, %c0_i32_8 : i32
    %13 = arith.extui %12 : i1 to i32
    %c0_i32_9 = arith.constant 0 : i32
    %14 = arith.cmpi ne, %13, %c0_i32_9 : i32
    scf.if %14 {
      %c0_10 = arith.constant 0 : index
      %c0_11 = arith.constant 0 : index
      %15 = vector.load %arg5[%c0_10, %c0_11] : memref<1x512xf32, #tpu.memory_space<vmem>>, vector<1x512xf32>
      %16 = vector.shape_cast %15 : vector<1x512xf32> to vector<1x1x512xf32>
      %cst_12 = arith.constant dense<0.000000e+00> : vector<1xf32>
      %17 = vector.multi_reduction <add>, %16, %cst_12 [1, 2] : vector<1x1x512xf32> to vector<1xf32>
      %18 = vector.shape_cast %17 : vector<1xf32> to vector<1x1x1xf32>
      %19 = vector.extract %18[0, 0, 0] : f32 from vector<1x1x1xf32>
      %20 = vector.broadcast %19 : f32 to vector<1x128xf32>
      %c0_13 = arith.constant 0 : index
      %c0_14 = arith.constant 0 : index
      %21 = vector.load %arg4[%c0_13, %c0_14] : memref<1x128xf32, #tpu.memory_space<vmem>>, vector<1x128xf32>
      tpu.vector_store %arg4[%c0_13, %c0_14], %20 {strides = array<i32>} : memref<1x128xf32, #tpu.memory_space<vmem>>, vector<1x128xf32>,
    } else {
    }
    return
  }
  func.func @transform_0(%arg0: i32, %arg1: i32) -> (i32, i32) {
    %c1_i32 = arith.constant 1 : i32
    %0 = arith.muli %arg0, %c1_i32 : i32
    %1 = arith.addi %0, %arg1 : i32
    %c0_i32 = arith.constant 0 : i32
    %2 = arith.minsi %1, %c0_i32 : i32
    %c0_i32_0 = arith.constant 0 : i32
    %c0_i32_1 = arith.constant 0 : i32
    return %2, %c0_i32_0 : i32, i32
  }
  func.func @transform_1(%arg0: i32, %arg1: i32) -> (i32, i32) {
    %c1_i32 = arith.constant 1 : i32
    %0 = arith.muli %arg0, %c1_i32 : i32
    %1 = arith.addi %0, %arg1 : i32
    %c0_i32 = arith.constant 0 : i32
    %2 = arith.minsi %1, %c0_i32 : i32
    %c0_i32_0 = arith.constant 0 : i32
    %c0_i32_1 = arith.constant 0 : i32
    return %2, %c0_i32_0 : i32, i32
  }
  func.func @transform_2(%arg0: i32, %arg1: i32) -> (i32, i32) {
    %c0_i32 = arith.constant 0 : i32
    %c0_i32_0 = arith.constant 0 : i32
    return %c0_i32, %arg0 : i32, i32
  }
}

</mosaic_0001>

<llo_original>
// kernel: tpu_custom_call.1
$region0: #{tpu_custom_call.1}
  #allocation0 [shape = 'u32[]', space=smem, size = 0x4, offset = 0x4, fixed_abs, tag = 'smem constant byte address 0x4 - core index']
  #allocation1 [shape = 'u32[72,128]{1,0:T(1,128)}', space=vmem, size = 0x9000, scoped, tag = 'internal scratch']
  #allocation2 [shape = 'f32[1,512]{1,0:T(1,128)}', space=vmem, size = 0x800, scoped, tag = 'scratch operand']
  %s0 = inlined_call_operand.hbm [shape: f32[4,512], index: 0, kind: input, shape index: {}]
  %s1 = inlined_call_operand.hbm [shape: f32[4,512], index: 1, kind: input, shape index: {}]
  %s2 = inlined_call_operand.hbm [shape: f32[1,128], index: 2, kind: output, shape index: {}]
  %s3 = sld [smem:[#allocation0]]
  $region34: #{tpu_custom_call.1} parent=0
    _
  %s5 = ssub.s32 1, %s3
  %s6 = scalar_select 0, %s5, %s3
  $region1: #{tpu_custom_call.1} parent=0
    #allocation3 [shape = 'u8[8192]{0}', space=vmem, size = 0x2000, scoped, tag = 'input window, operand 0, single buffered']
    #allocation4 [shape = 's32[1]{0}', space=sflag, size = 0x4, scoped, tag = 'scoped memory for tpu_custom_call.1']
    #allocation5 [shape = 's32[1]{0}', space=sflag, size = 0x4, scoped, tag = 'scoped memory for tpu_custom_call.1']
    #allocation6 [shape = 'u8[8192]{0}', space=vmem, size = 0x2000, scoped, tag = 'input window, operand 1, single buffered']
    #allocation7 [shape = 's32[1]{0}', space=sflag, size = 0x4, scoped, tag = 'scoped memory for tpu_custom_call.1']
    #allocation8 [shape = 'u8[512]{0}', space=vmem, size = 0x400, scoped, tag = 'output window, operand 0, single buffered']
    %7 = vsyncpa [#allocation4], 0
    %8 = vsyncpa [#allocation7], 0
    %9 = vsyncpa [#allocation5], 0
    // Predicated region
    $region2: #{tpu_custom_call.1} parent=1 // pred_check
      _
    $region3: #{tpu_custom_call.1} parent=1 // pred_check_branch
      %11 = sbr.rel (0) target = $region5
    $region4: #{tpu_custom_call.1} parent=1 // pred_region
      %s12 = sadd.s32 0, 0
      %p13 = scmp.lt.s32.totalorder %s12, 0
      %s14 = scalar_select %p13, %s12, 0
      %16 = vsyncadd [#allocation4], 0
      %s17 = smul.addr %s14, 4
      %s18 = smul.addr %s17, 4
      %s19 = scalar_lea.hbm %s0, %s18
      %s21 = sshll.u32 %s19, 4
      %s22 = int_to_ptr.hbm [resolvable:$true] %s21
      %s23 = sshll.u32 [#allocation3], 4
      %s24 = int_to_ptr.vmem [resolvable:$true] %s23
      %26 = dma.hbm_to_vmem [thread:$0]  %s22, 256, %s24, [#allocation4]
    $region5: #{tpu_custom_call.1} parent=1 // pred_fallthru
      _
    // Predicated region
    $region6: #{tpu_custom_call.1} parent=1 // pred_check
      _
    $region7: #{tpu_custom_call.1} parent=1 // pred_check_branch
      %28 = sbr.rel (0) target = $region9
    $region8: #{tpu_custom_call.1} parent=1 // pred_region
      %s29 = sadd.s32 0, 0
      %p30 = scmp.lt.s32.totalorder %s29, 0
      %s31 = scalar_select %p30, %s29, 0
      %33 = vsyncadd [#allocation7], 0
      %s34 = smul.addr %s31, 4
      %s35 = smul.addr %s34, 4
      %s36 = scalar_lea.hbm %s1, %s35
      %s38 = sshll.u32 %s36, 4
      %s39 = int_to_ptr.hbm [resolvable:$true] %s38
      %s40 = sshll.u32 [#allocation6], 4
      %s41 = int_to_ptr.vmem [resolvable:$true] %s40
      %43 = dma.hbm_to_vmem [thread:$0]  %s39, 256, %s41, [#allocation7]
    $region9: #{tpu_custom_call.1} parent=1 // pred_fallthru
      _
    // Predicated region
    $region10: #{tpu_custom_call.1} parent=1 // pred_check
      _
    $region11: #{tpu_custom_call.1} parent=1 // pred_check_branch
      %45 = sbr.rel (0) target = $region13
    $region12: #{tpu_custom_call.1} parent=1 // pred_region
      %47 = dma.done [#allocation4], 256
    $region13: #{tpu_custom_call.1} parent=1 // pred_fallthru
      _
    // Predicated region
    $region14: #{tpu_custom_call.1} parent=1 // pred_check
      _
    $region15: #{tpu_custom_call.1} parent=1 // pred_check_branch
      %49 = sbr.rel (0) target = $region17
    $region16: #{tpu_custom_call.1} parent=1 // pred_region
      %51 = dma.done [#allocation7], 256
    $region17: #{tpu_custom_call.1} parent=1 // pred_fallthru
      _
    %s52 = sadd.s32 0, 0
    %p53 = scmp.lt.s32.totalorder %s52, 0
    %s54 = scalar_select %p53, %s52, 0
    %s55 = sadd.s32 0, 0
    %p56 = scmp.lt.s32.totalorder %s55, 0
    %s57 = scalar_select %p56, %s55, 0
    %p58 = scmp.eq.s32.totalorder 0, 0
    // Predicated region
    $region18: #{tpu_custom_call.1} parent=1 // pred_check
      %p59 = pneg %p58
    $region19: #{tpu_custom_call.1} parent=1 // pred_check_branch
      %61 = sbr.rel (%p59) target = $region21
    $region20: #{tpu_custom_call.1} parent=1 // pred_region
      %v62 = vlaneseq
      %vm63 = vcmp.ge.s32.totalorder %v62, 0
      %vm64 = vcmp.lt.s32.totalorder %v62, 512
      %vm65 = vmand %vm63, %vm64
      %66 = vst.msk [vmem:[#allocation2] sm:$0xf] %vm65, 0.0
    $region21: #{tpu_custom_call.1} parent=1 // pred_fallthru
      _
    %v67 = vld [vmem:[#allocation3] sm:$0xff]
    %v68 = vld [vmem:[#allocation3 + $0x8] sm:$0xff]
    %v69 = vld [vmem:[#allocation6] sm:$0xff]
    %v70 = vld [vmem:[#allocation6 + $0x8] sm:$0xff]
    %v71 = vsub.f32 %v67, %v69
    %v72 = vsub.f32 %v68, %v70
    %v73 = vmul.f32 %v71, %v71
    %v74 = vmul.f32 %v72, %v72
    %v75 = vld [vmem:[#allocation2] sm:$0xf]
    %78 = vst [vmem:[#allocation1] ss:$2 sm:$0xff] %v73
    %s79 = scalar_lea.vmem [#allocation1], 16
    %80 = vst [vmem:[%s79] ss:$2 sm:$0xff] %v74
    %v81 = vld.sshfl [vmem:[#allocation1] sm:$0xff pattern:$0x75316420]
    %v82 = vld.sshfl [vmem:[#allocation1 + $0x8] sm:$0xff pattern:$0x75316420]
    %v83 = vld.sshfl [vmem:[#allocation1 + $0x10] sm:$0xff pattern:$0x75316420]
    %v84 = vld.sshfl [vmem:[#allocation1 + $0x18] sm:$0xff pattern:$0x75316420]
    %vm89 = vcmask 1043456
    %v90 = vsel %vm89, %v81, 0.0
    %v91 = vrot.slane %v90, 4
    %v92 = vadd.f32 %v90, %v91
    %v93 = vrot.slane %v92, 2
    %v94 = vadd.f32 %v92, %v93
    %v95 = vrot.slane %v94, 1
    %v96 = vadd.f32 %v94, %v95
    %v97 = vsel %vm89, %v82, 0.0
    %v98 = vrot.slane %v97, 4
    %v99 = vadd.f32 %v97, %v98
    %v100 = vrot.slane %v99, 2
    %v101 = vadd.f32 %v99, %v100
    %v102 = vrot.slane %v101, 1
    %v103 = vadd.f32 %v101, %v102
    %v104 = vsel %vm89, %v83, 0.0
    %v105 = vrot.slane %v104, 4
    %v106 = vadd.f32 %v104, %v105
    %v107 = vrot.slane %v106, 2
    %v108 = vadd.f32 %v106, %v107
    %v109 = vrot.slane %v108, 1
    %v110 = vadd.f32 %v108, %v109
    %v111 = vsel %vm89, %v84, 0.0
    %v112 = vrot.slane %v111, 4
    %v113 = vadd.f32 %v111, %v112
    %v114 = vrot.slane %v113, 2
    %v115 = vadd.f32 %v113, %v114
    %v116 = vrot.slane %v115, 1
    %v117 = vadd.f32 %v115, %v116
    %v122 = vrot.slane %v103, 7
    %v123 = vrot.slane %v110, 6
    %v124 = vrot.slane %v117, 5
    %vm125 = vcmask 1040384
    %v126 = vsel %vm125, %v96, %v122
    %vm127 = vcmask 1042434
    %v128 = vsel %vm127, %v123, %v124
    %vm129 = vcmask 1041408
    %v130 = vsel %vm129, %v126, %v128
    %v132 = vadd.f32 %v75, %v130
    %v133 = vlaneseq
    %vm134 = vcmp.ge.s32.totalorder %v133, 0
    %vm135 = vcmp.lt.s32.totalorder %v133, 512
    %vm136 = vmand %vm134, %vm135
    %137 = vst.msk [vmem:[#allocation2] sm:$0xf] %vm136, %v132
    // Predicated region
    $region22: #{tpu_custom_call.1} parent=1 // pred_check
      %p138 = pneg %p58
    $region23: #{tpu_custom_call.1} parent=1 // pred_check_branch
      %140 = sbr.rel (%p138) target = $region25
    $region24: #{tpu_custom_call.1} parent=1 // pred_region
      %v141 = vld [vmem:[#allocation2] sm:$0xf]
      %v143 = vperm.slane %v141, 0
      %v144 = vperm.slane %v141, 1
      %v145 = vperm.slane %v141, 2
      %v146 = vperm.slane %v141, 3
      %v151 = vsel %vm125, %v143, 0.0
      %v152 = vsel %vm125, %v144, 0.0
      %v153 = vadd.f32 %v151, %v152
      %v154 = vsel %vm125, %v145, 0.0
      %v155 = vadd.f32 %v153, %v154
      %v156 = vsel %vm125, %v146, 0.0
      %v157 = vadd.f32 %v155, %v156
      %158 = vadd.xlane.f32.xlu0 %v157
      %v159 = vpop.xlane.xlu0 %158
      %v160 = vrot.slane %v159, 4
      %v161 = vadd.f32 %v159, %v160
      %v162 = vrot.slane %v161, 2
      %v163 = vadd.f32 %v161, %v162
      %v164 = vrot.slane %v163, 1
      %v165 = vadd.f32 %v163, %v164
      %s166 = vtos %v165
      %v167 = vstv %s166
      %168 = vst [vmem:[#allocation8] sm:$0x1] %v167
    $region25: #{tpu_custom_call.1} parent=1 // pred_fallthru
      _
    // Predicated region
    $region26: #{tpu_custom_call.1} parent=1 // pred_check
      _
    $region27: #{tpu_custom_call.1} parent=1 // pred_check_branch
      %170 = sbr.rel (0) target = $region29
    $region28: #{tpu_custom_call.1} parent=1 // pred_region
      %172 = vsyncadd [#allocation5], 0
      %s174 = sshll.u32 [#allocation8], 4
      %s175 = int_to_ptr.vmem [resolvable:$true] %s174
      %s176 = sshll.u32 %s2, 4
      %s177 = int_to_ptr.hbm [resolvable:$true] %s176
      %179 = dma.vmem_to_hbm [thread:$0]  %s175, 16, %s177, [#allocation5]
    $region29: #{tpu_custom_call.1} parent=1 // pred_fallthru
      _
    // Predicated region
    $region30: #{tpu_custom_call.1} parent=1 // pred_check
      _
    $region31: #{tpu_custom_call.1} parent=1 // pred_check_branch
      %181 = sbr.rel (0) target = $region33
    $region32: #{tpu_custom_call.1} parent=1 // pred_region
      %183 = dma.done [#allocation5], 16
    $region33: #{tpu_custom_call.1} parent=1 // pred_fallthru
      _
    %184 = vsyncpa [#allocation4], 1
    %185 = vsyncpa [#allocation7], 1
    %186 = vsyncpa [#allocation5], 1

</llo_original>
